<compile_context>
chip_gen: v7x
topology: tpu7x:2x2x1
jax: 0.10.0
libtpu: 0.0.40
codegen_flags: <defaults>
</compile_context>

<pallas_src>
import functools

import jax
import jax.numpy as jnp
from jax.experimental import pallas as pl
from jax.experimental.pallas import tpu as pltpu

LANE = 128
SUBLANE = 8


def encoder_mlp_kernel(x_ref, c_ref,
                       w1x_ref, w1c_ref, b1_ref,
                       w2_ref, b2_ref,
                       w3_ref, b3_ref,
                       w4_ref, b4_ref,
                       out_ref):
    """fc = Linear->ReLU, Linear->ReLU, Linear->ReLU, Linear   (depth=2).

    concat(x, cond) is fused as two matmuls against the split first-layer
    weight.  bf16 operands at every dot, f32 accumulate / bias / ReLU.
    The last layer's weight is pre-arranged so out = [mu | logvar | logvar | 0].
    """
    x_bf = x_ref[...].astype(jnp.bfloat16)
    c_bf = c_ref[...].astype(jnp.bfloat16)
    h = (jnp.dot(x_bf, w1x_ref[...], preferred_element_type=jnp.float32)
         + jnp.dot(c_bf, w1c_ref[...], preferred_element_type=jnp.float32)
         + b1_ref[...])
    h = jnp.maximum(h, 0.0)
    h = jnp.dot(h.astype(jnp.bfloat16), w2_ref[...],
                preferred_element_type=jnp.float32) + b2_ref[...]
    h = jnp.maximum(h, 0.0)
    h = jnp.dot(h.astype(jnp.bfloat16), w3_ref[...],
                preferred_element_type=jnp.float32) + b3_ref[...]
    h = jnp.maximum(h, 0.0)
    out_ref[...] = (jnp.dot(h.astype(jnp.bfloat16), w4_ref[...],
                            preferred_element_type=jnp.float32)
                    + b4_ref[...]).astype(out_ref.dtype)


def init_params(key, input_dim, output_dim, width, depth):
    """Deterministic init mimicking nn.Linear's U(-1/sqrt(fan_in), ...).

    Returns [w1, b1, w2, b2, w3, b3, w4, b4] in f32, weights laid out as
    [in_features, out_features] (transpose of PyTorch's [out, in])."""
    dims = [input_dim] + [width] * (depth + 1) + [output_dim]
    params = []
    for fi, fo in zip(dims[:-1], dims[1:]):
        key, kw, kb = jax.random.split(key, 3)
        bound = 1.0 / (fi ** 0.5)
        w = jax.random.uniform(kw, (fi, fo), jnp.float32, -bound, bound)
        b = jax.random.uniform(kb, (1, fo), jnp.float32, -bound, bound)
        params += [w, b]
    return params


def _round_up(n, m):
    return ((n + m - 1) // m) * m


def prepare_kernel_params(params, data_dim, latent_dim):
    """Weight prep (done once, outside the hot path):
      * split w1 along K into (x | cond) halves,
      * duplicate the logvar columns of the last layer so the kernel emits
        [mu | logvar | logvar] directly (no JAX-side concat afterwards),
      * zero-pad the last layer to a lane-dense 128-wide output slab,
      * cast weights to bf16 (biases stay f32)."""
    w1, b1, w2, b2, w3, b3, w4, b4 = params
    w1x = w1[:data_dim].astype(jnp.bfloat16)
    w1c = w1[data_dim:].astype(jnp.bfloat16)

    # [mu | logvar | logvar] column layout for the final layer.
    w4_dup = jnp.concatenate(
        [w4[:, :latent_dim], w4[:, latent_dim:], w4[:, latent_dim:]], axis=1)
    b4_dup = jnp.concatenate(
        [b4[:, :latent_dim], b4[:, latent_dim:], b4[:, latent_dim:]], axis=1)
    used = w4_dup.shape[1]
    out_pad = _round_up(used, LANE)
    w4p = jnp.pad(w4_dup, ((0, 0), (0, out_pad - used))).astype(jnp.bfloat16)
    b4p = jnp.pad(b4_dup, ((0, 0), (0, out_pad - used)))

    return (w1x, w1c, b1,
            w2.astype(jnp.bfloat16), b2,
            w3.astype(jnp.bfloat16), b3,
            w4p, b4p)


@functools.partial(jax.jit, static_argnames=("latent_dim",))
def encoder_forward(x, cond, kparams, latent_dim):
    batch, data_dim = x.shape
    cond_dim = cond.shape[1]
    out_pad = kparams[-1].shape[1]          # lane-dense padded output width

    # Batch tiling: up to 256-row tiles (amortizes per-step overhead, tiny
    # VMEM footprint); a single sublane-aligned tile for small batches.
    tm = min(256, _round_up(batch, SUBLANE))
    batch_pad = _round_up(batch, tm)
    if batch_pad != batch:
        x = jnp.pad(x, ((0, batch_pad - batch), (0, 0)))
        cond = jnp.pad(cond, ((0, batch_pad - batch), (0, 0)))
    grid = batch_pad // tm

    def act_spec(d):
        return pl.BlockSpec((tm, d), lambda i: (i, 0))

    def wt_spec(a):
        return pl.BlockSpec(a.shape, lambda i: (0, 0))   # VMEM-resident

    out = pl.pallas_call(
        encoder_mlp_kernel,
        out_shape=jax.ShapeDtypeStruct((batch_pad, out_pad), jnp.float32),
        grid_spec=pltpu.PrefetchScalarGridSpec(
            num_scalar_prefetch=0,
            grid=(grid,),
            in_specs=[act_spec(data_dim), act_spec(cond_dim)]
                     + [wt_spec(p) for p in kparams],
            out_specs=pl.BlockSpec((tm, out_pad), lambda i: (i, 0)),
        ),
        compiler_params=pltpu.CompilerParams(
            dimension_semantics=("parallel",)),
    )(x, cond, *kparams)

    mu = out[:batch, :latent_dim]
    logvar = out[:batch, latent_dim:latent_dim + 2 * (latent_dim - 1)]
    return mu, logvar


def reference_forward_bf16(x, cond, params, latent_dim=2):
    """Pure-JAX reference mirroring the kernel's bf16-weight / f32-accumulate
    computation (and the PyTorch module's structure)."""
    bf = jnp.bfloat16
    h = jnp.concatenate([x, cond], axis=-1)
    for i in range(0, len(params) - 2, 2):
        h = jnp.dot(h.astype(bf), params[i].astype(bf),
                    preferred_element_type=jnp.float32) + params[i + 1]
        h = jnp.maximum(h, 0.0)
    out = jnp.dot(h.astype(bf), params[-2].astype(bf),
                  preferred_element_type=jnp.float32) + params[-1]
    mu = out[:, :latent_dim]
    lv = out[:, latent_dim:]
    return mu, jnp.concatenate([lv, lv], axis=-1)


def reference_forward_f32(x, cond, params, latent_dim=2):
    """Full-precision reference (loose-tolerance semantic sanity check)."""
    h = jnp.concatenate([x, cond], axis=-1)
    for i in range(0, len(params) - 2, 2):
        h = jnp.maximum(h @ params[i] + params[i + 1], 0.0)
    out = h @ params[-2] + params[-1]
    mu = out[:, :latent_dim]
    lv = out[:, latent_dim:]
    return mu, jnp.concatenate([lv, lv], axis=-1)


def _check(batch, data_dim, cond_dim, params, kparams, latent_dim, output_dim, seed):
    kx, kc = jax.random.split(jax.random.PRNGKey(seed), 2)
    x = jax.random.normal(kx, (batch, data_dim), jnp.float32)
    cond = jax.random.normal(kc, (batch, cond_dim), jnp.float32)

    mu, logvar = encoder_forward(x, cond, kparams, latent_dim=latent_dim)
    jax.block_until_ready((mu, logvar))

    mu_bf, lv_bf = reference_forward_bf16(x, cond, params, latent_dim)
    mu_f32, lv_f32 = reference_forward_f32(x, cond, params, latent_dim)

    assert mu.shape == (batch, latent_dim)
    assert logvar.shape == (batch, 2 * (output_dim - latent_dim))
    # Tight check vs. the matching bf16/f32-accumulate computation.
    assert jnp.allclose(mu, mu_bf, atol=2e-3, rtol=2e-3)
    assert jnp.allclose(logvar, lv_bf, atol=2e-3, rtol=2e-3)
    # Loose check vs. the full-f32 PyTorch-equivalent reference.
    assert jnp.allclose(mu, mu_f32, atol=1e-1, rtol=1e-1)
    assert jnp.allclose(logvar, lv_f32, atol=1e-1, rtol=1e-1)


if __name__ == "__main__":
    # Module defaults: width=64, depth=2, latent_dim=2, data_dim=640, cond_dim=4.
    data_dim, cond_dim = 640, 4
    width, depth, latent_dim = 64, 2, 2
    input_dim = data_dim + cond_dim            # use_cond=True
    output_dim = 2 * latent_dim - 1            # = 3

    kp = jax.random.PRNGKey(0)
    params = init_params(kp, input_dim, output_dim, width, depth)
    kparams = prepare_kernel_params(params, data_dim, latent_dim)

    # Small batch: single tile, single grid step.
    _check(8, data_dim, cond_dim, params, kparams, latent_dim, output_dim, seed=1)
    # Larger batch: exercises batch padding + multi-step grid path.
    _check(300, data_dim, cond_dim, params, kparams, latent_dim, output_dim, seed=2)

    print("KERNEL_OK")
</pallas_src>

<mosaic_0001>
module attributes {stable_mosaic.version = 11 : i64} {
  func.func @encoder_mlp_kernel(%arg0: i32, %arg1: memref<8x640xf32, #tpu.memory_space<vmem>>, %arg2: memref<8x4xf32, #tpu.memory_space<vmem>>, %arg3: memref<640x64xbf16, #tpu.memory_space<vmem>>, %arg4: memref<4x64xbf16, #tpu.memory_space<vmem>>, %arg5: memref<1x64xf32, #tpu.memory_space<vmem>>, %arg6: memref<64x64xbf16, #tpu.memory_space<vmem>>, %arg7: memref<1x64xf32, #tpu.memory_space<vmem>>, %arg8: memref<64x64xbf16, #tpu.memory_space<vmem>>, %arg9: memref<1x64xf32, #tpu.memory_space<vmem>>, %arg10: memref<64x128xbf16, #tpu.memory_space<vmem>>, %arg11: memref<1x128xf32, #tpu.memory_space<vmem>>, %arg12: memref<8x128xf32, #tpu.memory_space<vmem>>) attributes {dimension_semantics = [#tpu.dimension_semantics<parallel>], iteration_bounds = array<i64: 1>, scalar_prefetch = 0 : i64, scratch_operands = 0 : i64, tpu.core_type = #tpu.core_type<tc>, window_params = [{transform_indices = @transform_0, window_bounds = array<i64: 8, 640>}, {transform_indices = @transform_1, window_bounds = array<i64: 8, 4>}, {pipeline_mode = #tpu.pipeline_mode<synchronous>, transform_indices = @transform_2, window_bounds = array<i64: 640, 64>}, {pipeline_mode = #tpu.pipeline_mode<synchronous>, transform_indices = @transform_3, window_bounds = array<i64: 4, 64>}, {pipeline_mode = #tpu.pipeline_mode<synchronous>, transform_indices = @transform_4, window_bounds = array<i64: 1, 64>}, {pipeline_mode = #tpu.pipeline_mode<synchronous>, transform_indices = @transform_5, window_bounds = array<i64: 64, 64>}, {pipeline_mode = #tpu.pipeline_mode<synchronous>, transform_indices = @transform_6, window_bounds = array<i64: 1, 64>}, {pipeline_mode = #tpu.pipeline_mode<synchronous>, transform_indices = @transform_7, window_bounds = array<i64: 64, 64>}, {pipeline_mode = #tpu.pipeline_mode<synchronous>, transform_indices = @transform_8, window_bounds = array<i64: 1, 64>}, {pipeline_mode = #tpu.pipeline_mode<synchronous>, transform_indices = @transform_9, window_bounds = array<i64: 64, 128>}, {pipeline_mode = #tpu.pipeline_mode<synchronous>, transform_indices = @transform_10, window_bounds = array<i64: 1, 128>}, {transform_indices = @transform_11, window_bounds = array<i64: 8, 128>}]} {
    %c0 = arith.constant 0 : index
    %c0_0 = arith.constant 0 : index
    %0 = vector.load %arg1[%c0, %c0_0] : memref<8x640xf32, #tpu.memory_space<vmem>>, vector<8x640xf32>
    %1 = arith.truncf %0 : vector<8x640xf32> to vector<8x640xbf16>
    %c0_1 = arith.constant 0 : index
    %c0_2 = arith.constant 0 : index
    %2 = vector.load %arg2[%c0_1, %c0_2] : memref<8x4xf32, #tpu.memory_space<vmem>>, vector<8x4xf32>
    %3 = arith.truncf %2 : vector<8x4xf32> to vector<8x4xbf16>
    %c0_3 = arith.constant 0 : index
    %c0_4 = arith.constant 0 : index
    %4 = vector.load %arg3[%c0_3, %c0_4] : memref<640x64xbf16, #tpu.memory_space<vmem>>, vector<640x64xbf16>
    %cst = arith.constant dense<0.000000e+00> : vector<8x64xf32>
    %5 = tpu.matmul %1, %4, %cst {dimension_numbers = #tpu.dot_dimension_numbers<[1], [0], [0], [1], [0, 0, 1, 1], [], []>} : vector<8x640xbf16>, vector<640x64xbf16>, vector<8x64xf32> -> vector<8x64xf32>
    %c0_5 = arith.constant 0 : index
    %c0_6 = arith.constant 0 : index
    %6 = vector.load %arg4[%c0_5, %c0_6] : memref<4x64xbf16, #tpu.memory_space<vmem>>, vector<4x64xbf16>
    %cst_7 = arith.constant dense<0.000000e+00> : vector<8x64xf32>
    %7 = tpu.matmul %3, %6, %cst_7 {dimension_numbers = #tpu.dot_dimension_numbers<[1], [0], [0], [1], [0, 0, 1, 1], [], []>} : vector<8x4xbf16>, vector<4x64xbf16>, vector<8x64xf32> -> vector<8x64xf32>
    %8 = arith.addf %5, %7 : vector<8x64xf32>
    %c0_8 = arith.constant 0 : index
    %c0_9 = arith.constant 0 : index
    %9 = vector.load %arg5[%c0_8, %c0_9] : memref<1x64xf32, #tpu.memory_space<vmem>>, vector<1x64xf32>
    %10 = vector.broadcast %9 : vector<1x64xf32> to vector<8x64xf32>
    %11 = arith.addf %8, %10 : vector<8x64xf32>
    %cst_10 = arith.constant 0.000000e+00 : f32
    %12 = vector.broadcast %cst_10 : f32 to vector<8x64xf32>
    %13 = arith.maximumf %11, %12 : vector<8x64xf32>
    %14 = arith.truncf %13 : vector<8x64xf32> to vector<8x64xbf16>
    %c0_11 = arith.constant 0 : index
    %c0_12 = arith.constant 0 : index
    %15 = vector.load %arg6[%c0_11, %c0_12] : memref<64x64xbf16, #tpu.memory_space<vmem>>, vector<64x64xbf16>
    %cst_13 = arith.constant dense<0.000000e+00> : vector<8x64xf32>
    %16 = tpu.matmul %14, %15, %cst_13 {dimension_numbers = #tpu.dot_dimension_numbers<[1], [0], [0], [1], [0, 0, 1, 1], [], []>} : vector<8x64xbf16>, vector<64x64xbf16>, vector<8x64xf32> -> vector<8x64xf32>
    %c0_14 = arith.constant 0 : index
    %c0_15 = arith.constant 0 : index
    %17 = vector.load %arg7[%c0_14, %c0_15] : memref<1x64xf32, #tpu.memory_space<vmem>>, vector<1x64xf32>
    %18 = vector.broadcast %17 : vector<1x64xf32> to vector<8x64xf32>
    %19 = arith.addf %16, %18 : vector<8x64xf32>
    %cst_16 = arith.constant 0.000000e+00 : f32
    %20 = vector.broadcast %cst_16 : f32 to vector<8x64xf32>
    %21 = arith.maximumf %19, %20 : vector<8x64xf32>
    %22 = arith.truncf %21 : vector<8x64xf32> to vector<8x64xbf16>
    %c0_17 = arith.constant 0 : index
    %c0_18 = arith.constant 0 : index
    %23 = vector.load %arg8[%c0_17, %c0_18] : memref<64x64xbf16, #tpu.memory_space<vmem>>, vector<64x64xbf16>
    %cst_19 = arith.constant dense<0.000000e+00> : vector<8x64xf32>
    %24 = tpu.matmul %22, %23, %cst_19 {dimension_numbers = #tpu.dot_dimension_numbers<[1], [0], [0], [1], [0, 0, 1, 1], [], []>} : vector<8x64xbf16>, vector<64x64xbf16>, vector<8x64xf32> -> vector<8x64xf32>
    %c0_20 = arith.constant 0 : index
    %c0_21 = arith.constant 0 : index
    %25 = vector.load %arg9[%c0_20, %c0_21] : memref<1x64xf32, #tpu.memory_space<vmem>>, vector<1x64xf32>
    %26 = vector.broadcast %25 : vector<1x64xf32> to vector<8x64xf32>
    %27 = arith.addf %24, %26 : vector<8x64xf32>
    %cst_22 = arith.constant 0.000000e+00 : f32
    %28 = vector.broadcast %cst_22 : f32 to vector<8x64xf32>
    %29 = arith.maximumf %27, %28 : vector<8x64xf32>
    %30 = arith.truncf %29 : vector<8x64xf32> to vector<8x64xbf16>
    %c0_23 = arith.constant 0 : index
    %c0_24 = arith.constant 0 : index
    %31 = vector.load %arg10[%c0_23, %c0_24] : memref<64x128xbf16, #tpu.memory_space<vmem>>, vector<64x128xbf16>
    %cst_25 = arith.constant dense<0.000000e+00> : vector<8x128xf32>
    %32 = tpu.matmul %30, %31, %cst_25 {dimension_numbers = #tpu.dot_dimension_numbers<[1], [0], [0], [1], [0, 0, 1, 1], [], []>} : vector<8x64xbf16>, vector<64x128xbf16>, vector<8x128xf32> -> vector<8x128xf32>
    %c0_26 = arith.constant 0 : index
    %c0_27 = arith.constant 0 : index
    %33 = vector.load %arg11[%c0_26, %c0_27] : memref<1x128xf32, #tpu.memory_space<vmem>>, vector<1x128xf32>
    %34 = vector.broadcast %33 : vector<1x128xf32> to vector<8x128xf32>
    %35 = arith.addf %32, %34 : vector<8x128xf32>
    %c0_28 = arith.constant 0 : index
    %c0_29 = arith.constant 0 : index
    %36 = vector.load %arg12[%c0_28, %c0_29] : memref<8x128xf32, #tpu.memory_space<vmem>>, vector<8x128xf32>
    tpu.vector_store %arg12[%c0_28, %c0_29], %35 {strides = array<i32>} : memref<8x128xf32, #tpu.memory_space<vmem>>, vector<8x128xf32>,
    return
  }
  func.func @transform_0(%arg0: i32) -> (i32, i32) {
    %c0_i32 = arith.constant 0 : i32
    %c0_i32_0 = arith.constant 0 : i32
    return %arg0, %c0_i32 : i32, i32
  }
  func.func @transform_1(%arg0: i32) -> (i32, i32) {
    %c0_i32 = arith.constant 0 : i32
    %c0_i32_0 = arith.constant 0 : i32
    return %arg0, %c0_i32 : i32, i32
  }
  func.func @transform_2(%arg0: i32) -> (i32, i32) {
    %c0_i32 = arith.constant 0 : i32
    %c0_i32_0 = arith.constant 0 : i32
    %c0_i32_1 = arith.constant 0 : i32
    return %c0_i32, %c0_i32_0 : i32, i32
  }
  func.func @transform_3(%arg0: i32) -> (i32, i32) {
    %c0_i32 = arith.constant 0 : i32
    %c0_i32_0 = arith.constant 0 : i32
    %c0_i32_1 = arith.constant 0 : i32
    return %c0_i32, %c0_i32_0 : i32, i32
  }
  func.func @transform_4(%arg0: i32) -> (i32, i32) {
    %c0_i32 = arith.constant 0 : i32
    %c0_i32_0 = arith.constant 0 : i32
    %c0_i32_1 = arith.constant 0 : i32
    return %c0_i32, %c0_i32_0 : i32, i32
  }
  func.func @transform_5(%arg0: i32) -> (i32, i32) {
    %c0_i32 = arith.constant 0 : i32
    %c0_i32_0 = arith.constant 0 : i32
    %c0_i32_1 = arith.constant 0 : i32
    return %c0_i32, %c0_i32_0 : i32, i32
  }
  func.func @transform_6(%arg0: i32) -> (i32, i32) {
    %c0_i32 = arith.constant 0 : i32
    %c0_i32_0 = arith.constant 0 : i32
    %c0_i32_1 = arith.constant 0 : i32
    return %c0_i32, %c0_i32_0 : i32, i32
  }
  func.func @transform_7(%arg0: i32) -> (i32, i32) {
    %c0_i32 = arith.constant 0 : i32
    %c0_i32_0 = arith.constant 0 : i32
    %c0_i32_1 = arith.constant 0 : i32
    return %c0_i32, %c0_i32_0 : i32, i32
  }
  func.func @transform_8(%arg0: i32) -> (i32, i32) {
    %c0_i32 = arith.constant 0 : i32
    %c0_i32_0 = arith.constant 0 : i32
    %c0_i32_1 = arith.constant 0 : i32
    return %c0_i32, %c0_i32_0 : i32, i32
  }
  func.func @transform_9(%arg0: i32) -> (i32, i32) {
    %c0_i32 = arith.constant 0 : i32
    %c0_i32_0 = arith.constant 0 : i32
    %c0_i32_1 = arith.constant 0 : i32
    return %c0_i32, %c0_i32_0 : i32, i32
  }
  func.func @transform_10(%arg0: i32) -> (i32, i32) {
    %c0_i32 = arith.constant 0 : i32
    %c0_i32_0 = arith.constant 0 : i32
    %c0_i32_1 = arith.constant 0 : i32
    return %c0_i32, %c0_i32_0 : i32, i32
  }
  func.func @transform_11(%arg0: i32) -> (i32, i32) {
    %c0_i32 = arith.constant 0 : i32
    %c0_i32_0 = arith.constant 0 : i32
    return %arg0, %c0_i32 : i32, i32
  }
}

</mosaic_0001>

<llo_original>
// kernel: encoder_forward.1
$region0: #{encoder_forward.1}
  #allocation0 [shape = 'u32[]', space=smem, size = 0x4, offset = 0x4, fixed_abs, tag = 'smem constant byte address 0x4 - core index']
  #allocation1 [shape = 'u32[144,128]{1,0:T(1,128)}', space=vmem, size = 0x12000, scoped, tag = 'internal scratch']
  %s0 = inlined_call_operand.vmem [shape: f32[8,640], index: 0, kind: input, shape index: {}]
  %s1 = inlined_call_operand.vmem [shape: f32[8,4], index: 1, kind: input, shape index: {}]
  %s2 = inlined_call_operand.vmem [shape: bf16[640,64], index: 2, kind: input, shape index: {}]
  %s3 = inlined_call_operand.vmem [shape: bf16[4,64], index: 3, kind: input, shape index: {}]
  %s4 = inlined_call_operand.vmem [shape: f32[1,64], index: 4, kind: input, shape index: {}]
  %s5 = inlined_call_operand.vmem [shape: bf16[64,64], index: 5, kind: input, shape index: {}]
  %s6 = inlined_call_operand.vmem [shape: f32[1,64], index: 6, kind: input, shape index: {}]
  %s7 = inlined_call_operand.vmem [shape: bf16[64,64], index: 7, kind: input, shape index: {}]
  %s8 = inlined_call_operand.vmem [shape: f32[1,64], index: 8, kind: input, shape index: {}]
  %s9 = inlined_call_operand.vmem [shape: bf16[64,128], index: 9, kind: input, shape index: {}]
  %s10 = inlined_call_operand.vmem [shape: f32[1,128], index: 10, kind: input, shape index: {}]
  %s11 = inlined_call_operand.vmem [shape: f32[8,128], index: 11, kind: output, shape index: {}]
  %s12 = sld [smem:[#allocation0]]
  $region54: #{encoder_forward.1} parent=0
    _
  %s14 = ssub.s32 1, %s12
  %s15 = scalar_select 0, %s14, %s12
  // Predicated region
  $region2: #{encoder_forward.1} parent=0 // pred_check
    _
  $region3: #{encoder_forward.1} parent=0 // pred_check_branch
    %17 = sbr.rel (0) target = $region5
  $region4: #{encoder_forward.1} parent=0 // pred_region
    _
  $region5: #{encoder_forward.1} parent=0 // pred_fallthru
    _
  // Predicated region
  $region6: #{encoder_forward.1} parent=0 // pred_check
    _
  $region7: #{encoder_forward.1} parent=0 // pred_check_branch
    %19 = sbr.rel (0) target = $region9
  $region8: #{encoder_forward.1} parent=0 // pred_region
    _
  $region9: #{encoder_forward.1} parent=0 // pred_fallthru
    _
  // Predicated region
  $region10: #{encoder_forward.1} parent=0 // pred_check
    _
  $region11: #{encoder_forward.1} parent=0 // pred_check_branch
    %21 = sbr.rel (0) target = $region13
  $region12: #{encoder_forward.1} parent=0 // pred_region
    _
  $region13: #{encoder_forward.1} parent=0 // pred_fallthru
    _
  // Predicated region
  $region14: #{encoder_forward.1} parent=0 // pred_check
    _
  $region15: #{encoder_forward.1} parent=0 // pred_check_branch
    %23 = sbr.rel (0) target = $region17
  $region16: #{encoder_forward.1} parent=0 // pred_region
    _
  $region17: #{encoder_forward.1} parent=0 // pred_fallthru
    _
  // Predicated region
  $region18: #{encoder_forward.1} parent=0 // pred_check
    _
  $region19: #{encoder_forward.1} parent=0 // pred_check_branch
    %25 = sbr.rel (0) target = $region21
  $region20: #{encoder_forward.1} parent=0 // pred_region
    _
  $region21: #{encoder_forward.1} parent=0 // pred_fallthru
    _
  // Predicated region
  $region22: #{encoder_forward.1} parent=0 // pred_check
    _
  $region23: #{encoder_forward.1} parent=0 // pred_check_branch
    %27 = sbr.rel (0) target = $region25
  $region24: #{encoder_forward.1} parent=0 // pred_region
    _
  $region25: #{encoder_forward.1} parent=0 // pred_fallthru
    _
  // Predicated region
  $region26: #{encoder_forward.1} parent=0 // pred_check
    _
  $region27: #{encoder_forward.1} parent=0 // pred_check_branch
    %29 = sbr.rel (0) target = $region29
  $region28: #{encoder_forward.1} parent=0 // pred_region
    _
  $region29: #{encoder_forward.1} parent=0 // pred_fallthru
    _
  // Predicated region
  $region30: #{encoder_forward.1} parent=0 // pred_check
    _
  $region31: #{encoder_forward.1} parent=0 // pred_check_branch
    %31 = sbr.rel (0) target = $region33
  $region32: #{encoder_forward.1} parent=0 // pred_region
    _
  $region33: #{encoder_forward.1} parent=0 // pred_fallthru
    _
  // Predicated region
  $region34: #{encoder_forward.1} parent=0 // pred_check
    _
  $region35: #{encoder_forward.1} parent=0 // pred_check_branch
    %33 = sbr.rel (0) target = $region37
  $region36: #{encoder_forward.1} parent=0 // pred_region
    _
  $region37: #{encoder_forward.1} parent=0 // pred_fallthru
    _
  // Predicated region
  $region38: #{encoder_forward.1} parent=0 // pred_check
    _
  $region39: #{encoder_forward.1} parent=0 // pred_check_branch
    %35 = sbr.rel (0) target = $region41
  $region40: #{encoder_forward.1} parent=0 // pred_region
    _
  $region41: #{encoder_forward.1} parent=0 // pred_fallthru
    _
  // Predicated region
  $region42: #{encoder_forward.1} parent=0 // pred_check
    _
  $region43: #{encoder_forward.1} parent=0 // pred_check_branch
    %37 = sbr.rel (0) target = $region45
  $region44: #{encoder_forward.1} parent=0 // pred_region
    _
  $region45: #{encoder_forward.1} parent=0 // pred_fallthru
    _
  %v39 = vld [vmem:[%s0] sm:$0xff]
  %v40 = vld [vmem:[%s0 + $0x8] sm:$0xff]
  %v41 = vld [vmem:[%s0 + $0x10] sm:$0xff]
  %v42 = vld [vmem:[%s0 + $0x18] sm:$0xff]
  %v43 = vld [vmem:[%s0 + $0x20] sm:$0xff]
  %v44 = vpack.c.bf16 %v39, %v39
  %v45 = vpack.c.bf16 %v40, %v40
  %v46 = vpack.c.bf16 %v41, %v41
  %v47 = vpack.c.bf16 %v42, %v42
  %v48 = vpack.c.bf16 %v43, %v43
  %v49 = vld [vmem:[%s1] sm:$0xff]
  %v50 = vpack.c.bf16 %v49, %v49
  %v51 = vld [vmem:[%s2] sm:$0xf]
  %v52 = vld [vmem:[%s2 + $0x4] sm:$0xf]
  %v53 = vld [vmem:[%s2 + $0x8] sm:$0xf]
  %v54 = vld [vmem:[%s2 + $0xc] sm:$0xf]
  %v55 = vld [vmem:[%s2 + $0x10] sm:$0xf]
  %v56 = vld [vmem:[%s2 + $0x14] sm:$0xf]
  %v57 = vld [vmem:[%s2 + $0x18] sm:$0xf]
  %v58 = vld [vmem:[%s2 + $0x1c] sm:$0xf]
  %v59 = vld [vmem:[%s2 + $0x20] sm:$0xf]
  %v60 = vld [vmem:[%s2 + $0x24] sm:$0xf]
  %v61 = vld [vmem:[%s2 + $0x28] sm:$0xf]
  %v62 = vld [vmem:[%s2 + $0x2c] sm:$0xf]
  %v63 = vld [vmem:[%s2 + $0x30] sm:$0xf]
  %v64 = vld [vmem:[%s2 + $0x34] sm:$0xf]
  %v65 = vld [vmem:[%s2 + $0x38] sm:$0xf]
  %v66 = vld [vmem:[%s2 + $0x3c] sm:$0xf]
  %v67 = vld [vmem:[%s2 + $0x40] sm:$0xf]
  %v68 = vld [vmem:[%s2 + $0x44] sm:$0xf]
  %v69 = vld [vmem:[%s2 + $0x48] sm:$0xf]
  %v70 = vld [vmem:[%s2 + $0x4c] sm:$0xf]
  %v71 = vld [vmem:[%s2 + $0x50] sm:$0xf]
  %v72 = vld [vmem:[%s2 + $0x54] sm:$0xf]
  %v73 = vld [vmem:[%s2 + $0x58] sm:$0xf]
  %v74 = vld [vmem:[%s2 + $0x5c] sm:$0xf]
  %v75 = vld [vmem:[%s2 + $0x60] sm:$0xf]
  %v76 = vld [vmem:[%s2 + $0x64] sm:$0xf]
  %v77 = vld [vmem:[%s2 + $0x68] sm:$0xf]
  %v78 = vld [vmem:[%s2 + $0x6c] sm:$0xf]
  %v79 = vld [vmem:[%s2 + $0x70] sm:$0xf]
  %v80 = vld [vmem:[%s2 + $0x74] sm:$0xf]
  %v81 = vld [vmem:[%s2 + $0x78] sm:$0xf]
  %v82 = vld [vmem:[%s2 + $0x7c] sm:$0xf]
  %v83 = vld [vmem:[%s2 + $0x80] sm:$0xf]
  %v84 = vld [vmem:[%s2 + $0x84] sm:$0xf]
  %v85 = vld [vmem:[%s2 + $0x88] sm:$0xf]
  %v86 = vld [vmem:[%s2 + $0x8c] sm:$0xf]
  %v87 = vld [vmem:[%s2 + $0x90] sm:$0xf]
  %v88 = vld [vmem:[%s2 + $0x94] sm:$0xf]
  %v89 = vld [vmem:[%s2 + $0x98] sm:$0xf]
  %v90 = vld [vmem:[%s2 + $0x9c] sm:$0xf]
  %v91 = vld [vmem:[%s2 + $0xa0] sm:$0xf]
  %v92 = vld [vmem:[%s2 + $0xa4] sm:$0xf]
  %v93 = vld [vmem:[%s2 + $0xa8] sm:$0xf]
  %v94 = vld [vmem:[%s2 + $0xac] sm:$0xf]
  %v95 = vld [vmem:[%s2 + $0xb0] sm:$0xf]
  %v96 = vld [vmem:[%s2 + $0xb4] sm:$0xf]
  %v97 = vld [vmem:[%s2 + $0xb8] sm:$0xf]
  %v98 = vld [vmem:[%s2 + $0xbc] sm:$0xf]
  %v99 = vld [vmem:[%s2 + $0xc0] sm:$0xf]
  %v100 = vld [vmem:[%s2 + $0xc4] sm:$0xf]
  %v101 = vld [vmem:[%s2 + $0xc8] sm:$0xf]
  %v102 = vld [vmem:[%s2 + $0xcc] sm:$0xf]
  %v103 = vld [vmem:[%s2 + $0xd0] sm:$0xf]
  %v104 = vld [vmem:[%s2 + $0xd4] sm:$0xf]
  %v105 = vld [vmem:[%s2 + $0xd8] sm:$0xf]
  %v106 = vld [vmem:[%s2 + $0xdc] sm:$0xf]
  %v107 = vld [vmem:[%s2 + $0xe0] sm:$0xf]
  %v108 = vld [vmem:[%s2 + $0xe4] sm:$0xf]
  %v109 = vld [vmem:[%s2 + $0xe8] sm:$0xf]
  %v110 = vld [vmem:[%s2 + $0xec] sm:$0xf]
  %v111 = vld [vmem:[%s2 + $0xf0] sm:$0xf]
  %v112 = vld [vmem:[%s2 + $0xf4] sm:$0xf]
  %v113 = vld [vmem:[%s2 + $0xf8] sm:$0xf]
  %v114 = vld [vmem:[%s2 + $0xfc] sm:$0xf]
  %v115 = vld [vmem:[%s2 + $0x100] sm:$0xf]
  %v116 = vld [vmem:[%s2 + $0x104] sm:$0xf]
  %v117 = vld [vmem:[%s2 + $0x108] sm:$0xf]
  %v118 = vld [vmem:[%s2 + $0x10c] sm:$0xf]
  %v119 = vld [vmem:[%s2 + $0x110] sm:$0xf]
  %v120 = vld [vmem:[%s2 + $0x114] sm:$0xf]
  %v121 = vld [vmem:[%s2 + $0x118] sm:$0xf]
  %v122 = vld [vmem:[%s2 + $0x11c] sm:$0xf]
  %v123 = vld [vmem:[%s2 + $0x120] sm:$0xf]
  %v124 = vld [vmem:[%s2 + $0x124] sm:$0xf]
  %v125 = vld [vmem:[%s2 + $0x128] sm:$0xf]
  %v126 = vld [vmem:[%s2 + $0x12c] sm:$0xf]
  %v127 = vld [vmem:[%s2 + $0x130] sm:$0xf]
  %v128 = vld [vmem:[%s2 + $0x134] sm:$0xf]
  %v129 = vld [vmem:[%s2 + $0x138] sm:$0xf]
  %v130 = vld [vmem:[%s2 + $0x13c] sm:$0xf]
  %v131 = vld [vmem:[%s3] sm:$0x3]
  %vm132 = vcmask 31744
  %v134 = vsel %vm132, %v50, 0
  %vm136 = vcmask 1041408
  %v138 = vsel %vm136, %v131, 0
  %140 = vmatprep.subr.bf16.mxu0 0
  %141 = vmatpush1.bf16.msra.mxu0 %v138
  %142 = vmatprep.subr.bf16.mxu0 0
  %143 = vmatpush1.bf16.msra.mxu0 0
  %144 = vmatprep.subr.bf16.mxu0 0
  %145 = vmatpush1.bf16.msra.mxu0 0
  %146 = vmatprep.subr.bf16.mxu0 0
  %147 = vmatpush1.bf16.msra.mxu0 0
  %148 = vmatprep.subr.bf16.mxu0 0
  %149 = vmatpush1.bf16.msra.mxu0 0
  %150 = vmatprep.subr.bf16.mxu0 0
  %151 = vmatpush1.bf16.msra.mxu0 0
  %152 = vmatprep.subr.bf16.mxu0 0
  %153 = vmatpush1.bf16.msra.mxu0 0
  %154 = vmatprep.subr.bf16.mxu0 0
  %155 = vmatpush1.bf16.msra.mxu0 0
  %156 = vmatprep.subr.bf16.mxu0 0
  %157 = vmatpush1.bf16.msra.mxu0 0
  %158 = vmatprep.subr.bf16.mxu0 0
  %159 = vmatpush1.bf16.msra.mxu0 0
  %160 = vmatprep.subr.bf16.mxu0 0
  %161 = vmatpush1.bf16.msra.mxu0 0
  %162 = vmatprep.subr.bf16.mxu0 0
  %163 = vmatpush1.bf16.msra.mxu0 0
  %164 = vmatprep.subr.bf16.mxu0 0
  %165 = vmatpush1.bf16.msra.mxu0 0
  %166 = vmatprep.subr.bf16.mxu0 0
  %167 = vmatpush1.bf16.msra.mxu0 0
  %168 = vmatprep.subr.bf16.mxu0 0
  %169 = vmatpush1.bf16.msra.mxu0 0
  %170 = vmatprep.subr.bf16.mxu0 0
  %171 = vmatpush1.bf16.msra.mxu0 0
  %172 = vmatprep.mubr.bf16.mxu0 0
  %173 = vmatmul.mubr.bf16.gmra.mrb[0].mxu0 %v134
  %v174 = vpop.f32.mrb[0].mxu0
  %v175 = vadd.f32 0.0, %v174
  %v176 = vpop.f32.mrb[0].mxu0
  %v177 = vpop.f32.mrb[0].mxu0
  %v178 = vpop.f32.mrb[0].mxu0
  %179 = vdwg.mxu0
  %v260 = vunpack.c.l.b16 %v51
  %v261 = vunpack.c.l.b16 %v52
  %v262 = vunpack.c.l.b16 %v53
  %v263 = vunpack.c.l.b16 %v54
  %v264 = vunpack.c.l.b16 %v55
  %v265 = vunpack.c.l.b16 %v56
  %v266 = vunpack.c.l.b16 %v57
  %v267 = vunpack.c.l.b16 %v58
  %v268 = vunpack.c.l.b16 %v59
  %v269 = vunpack.c.l.b16 %v60
  %v270 = vunpack.c.l.b16 %v61
  %v271 = vunpack.c.l.b16 %v62
  %v272 = vunpack.c.l.b16 %v63
  %v273 = vunpack.c.l.b16 %v64
  %v274 = vunpack.c.l.b16 %v65
  %v275 = vunpack.c.l.b16 %v66
  %v276 = vunpack.c.l.b16 %v67
  %v277 = vunpack.c.l.b16 %v68
  %v278 = vunpack.c.l.b16 %v69
  %v279 = vunpack.c.l.b16 %v70
  %v280 = vunpack.c.l.b16 %v71
  %v281 = vunpack.c.l.b16 %v72
  %v282 = vunpack.c.l.b16 %v73
  %v283 = vunpack.c.l.b16 %v74
  %v284 = vunpack.c.l.b16 %v75
  %v285 = vunpack.c.l.b16 %v76
  %v286 = vunpack.c.l.b16 %v77
  %v287 = vunpack.c.l.b16 %v78
  %v288 = vunpack.c.l.b16 %v79
  %v289 = vunpack.c.l.b16 %v80
  %v290 = vunpack.c.l.b16 %v81
  %v291 = vunpack.c.l.b16 %v82
  %v292 = vunpack.c.l.b16 %v83
  %v293 = vunpack.c.l.b16 %v84
  %v294 = vunpack.c.l.b16 %v85
  %v295 = vunpack.c.l.b16 %v86
  %v296 = vunpack.c.l.b16 %v87
  %v297 = vunpack.c.l.b16 %v88
  %v298 = vunpack.c.l.b16 %v89
  %v299 = vunpack.c.l.b16 %v90
  %v300 = vunpack.c.l.b16 %v91
  %v301 = vunpack.c.l.b16 %v92
  %v302 = vunpack.c.l.b16 %v93
  %v303 = vunpack.c.l.b16 %v94
  %v304 = vunpack.c.l.b16 %v95
  %v305 = vunpack.c.l.b16 %v96
  %v306 = vunpack.c.l.b16 %v97
  %v307 = vunpack.c.l.b16 %v98
  %v308 = vunpack.c.l.b16 %v99
  %v309 = vunpack.c.l.b16 %v100
  %v310 = vunpack.c.l.b16 %v101
  %v311 = vunpack.c.l.b16 %v102
  %v312 = vunpack.c.l.b16 %v103
  %v313 = vunpack.c.l.b16 %v104
  %v314 = vunpack.c.l.b16 %v105
  %v315 = vunpack.c.l.b16 %v106
  %v316 = vunpack.c.l.b16 %v107
  %v317 = vunpack.c.l.b16 %v108
  %v318 = vunpack.c.l.b16 %v109
  %v319 = vunpack.c.l.b16 %v110
  %v320 = vunpack.c.l.b16 %v111
  %v321 = vunpack.c.l.b16 %v112
  %v322 = vunpack.c.l.b16 %v113
  %v323 = vunpack.c.l.b16 %v114
  %v324 = vunpack.c.l.b16 %v115
  %v325 = vunpack.c.l.b16 %v116
  %v326 = vunpack.c.l.b16 %v117
  %v327 = vunpack.c.l.b16 %v118
  %v328 = vunpack.c.l.b16 %v119
  %v329 = vunpack.c.l.b16 %v120
  %v330 = vunpack.c.l.b16 %v121
  %v331 = vunpack.c.l.b16 %v122
  %v332 = vunpack.c.l.b16 %v123
  %v333 = vunpack.c.l.b16 %v124
  %v334 = vunpack.c.l.b16 %v125
  %v335 = vunpack.c.l.b16 %v126
  %v336 = vunpack.c.l.b16 %v127
  %v337 = vunpack.c.l.b16 %v128
  %v338 = vunpack.c.l.b16 %v129
  %v339 = vunpack.c.l.b16 %v130
  %v340 = vpack.c.b16 %v261, %v260
  %v341 = vpack.c.b16 %v263, %v262
  %v342 = vpack.c.b16 %v265, %v264
  %v343 = vpack.c.b16 %v267, %v266
  %v344 = vpack.c.b16 %v269, %v268
  %v345 = vpack.c.b16 %v271, %v270
  %v346 = vpack.c.b16 %v273, %v272
  %v347 = vpack.c.b16 %v275, %v274
  %v348 = vpack.c.b16 %v277, %v276
  %v349 = vpack.c.b16 %v279, %v278
  %v350 = vpack.c.b16 %v281, %v280
  %v351 = vpack.c.b16 %v283, %v282
  %v352 = vpack.c.b16 %v285, %v284
  %v353 = vpack.c.b16 %v287, %v286
  %v354 = vpack.c.b16 %v289, %v288
  %v355 = vpack.c.b16 %v291, %v290
  %v356 = vpack.c.b16 %v293, %v292
  %v357 = vpack.c.b16 %v295, %v294
  %v358 = vpack.c.b16 %v297, %v296
  %v359 = vpack.c.b16 %v299, %v298
  %v360 = vpack.c.b16 %v301, %v300
  %v361 = vpack.c.b16 %v303, %v302
  %v362 = vpack.c.b16 %v305, %v304
  %v363 = vpack.c.b16 %v307, %v306
  %v364 = vpack.c.b16 %v309, %v308
  %v365 = vpack.c.b16 %v311, %v310
  %v366 = vpack.c.b16 %v313, %v312
  %v367 = vpack.c.b16 %v315, %v314
  %v368 = vpack.c.b16 %v317, %v316
  %v369 = vpack.c.b16 %v319, %v318
  %v370 = vpack.c.b16 %v321, %v320
  %v371 = vpack.c.b16 %v323, %v322
  %v372 = vpack.c.b16 %v325, %v324
  %v373 = vpack.c.b16 %v327, %v326
  %v374 = vpack.c.b16 %v329, %v328
  %v375 = vpack.c.b16 %v331, %v330
  %v376 = vpack.c.b16 %v333, %v332
  %v377 = vpack.c.b16 %v335, %v334
  %v378 = vpack.c.b16 %v337, %v336
  %v379 = vpack.c.b16 %v339, %v338
  %420 = vmatprep.subr.bf16.mxu0 0
  %421 = vmatpush1.bf16.msra.mxu0 %v340
  %422 = vmatprep.subr.bf16.mxu0 0
  %423 = vmatpush1.bf16.msra.mxu0 %v341
  %424 = vmatprep.subr.bf16.mxu0 0
  %425 = vmatpush1.bf16.msra.mxu0 %v342
  %426 = vmatprep.subr.bf16.mxu0 0
  %427 = vmatpush1.bf16.msra.mxu0 %v343
  %428 = vmatprep.subr.bf16.mxu0 0
  %429 = vmatpush1.bf16.msra.mxu0 %v344
  %430 = vmatprep.subr.bf16.mxu0 0
  %431 = vmatpush1.bf16.msra.mxu0 %v345
  %432 = vmatprep.subr.bf16.mxu0 0
  %433 = vmatpush1.bf16.msra.mxu0 %v346
  %434 = vmatprep.subr.bf16.mxu0 0
  %435 = vmatpush1.bf16.msra.mxu0 %v347
  %436 = vmatprep.subr.bf16.mxu0 0
  %437 = vmatpush1.bf16.msra.mxu0 %v348
  %438 = vmatprep.subr.bf16.mxu0 0
  %439 = vmatpush1.bf16.msra.mxu0 %v349
  %440 = vmatprep.subr.bf16.mxu0 0
  %441 = vmatpush1.bf16.msra.mxu0 %v350
  %442 = vmatprep.subr.bf16.mxu0 0
  %443 = vmatpush1.bf16.msra.mxu0 %v351
  %444 = vmatprep.subr.bf16.mxu0 0
  %445 = vmatpush1.bf16.msra.mxu0 %v352
  %446 = vmatprep.subr.bf16.mxu0 0
  %447 = vmatpush1.bf16.msra.mxu0 %v353
  %448 = vmatprep.subr.bf16.mxu0 0
  %449 = vmatpush1.bf16.msra.mxu0 %v354
  %450 = vmatprep.subr.bf16.mxu0 0
  %451 = vmatpush1.bf16.msra.mxu0 %v355
  %452 = vmatprep.mubr.bf16.mxu0 %v45
  %453 = vmatmul.mubr.bf16.gmra.mrb[0].mxu0 %v44
  %v454 = vpop.f32.mrb[0].mxu0
  %v455 = vadd.f32 %v175, %v454
  %v456 = vpop.f32.mrb[0].mxu0
  %v457 = vpop.f32.mrb[0].mxu0
  %v458 = vpop.f32.mrb[0].mxu0
  %459 = vdwg.mxu0
  %460 = vmatprep.subr.bf16.mxu0 0
  %461 = vmatpush1.bf16.msra.mxu0 %v356
  %462 = vmatprep.subr.bf16.mxu0 0
  %463 = vmatpush1.bf16.msra.mxu0 %v357
  %464 = vmatprep.subr.bf16.mxu0 0
  %465 = vmatpush1.bf16.msra.mxu0 %v358
  %466 = vmatprep.subr.bf16.mxu0 0
  %467 = vmatpush1.bf16.msra.mxu0 %v359
  %468 = vmatprep.subr.bf16.mxu0 0
  %469 = vmatpush1.bf16.msra.mxu0 %v360
  %470 = vmatprep.subr.bf16.mxu0 0
  %471 = vmatpush1.bf16.msra.mxu0 %v361
  %472 = vmatprep.subr.bf16.mxu0 0
  %473 = vmatpush1.bf16.msra.mxu0 %v362
  %474 = vmatprep.subr.bf16.mxu0 0
  %475 = vmatpush1.bf16.msra.mxu0 %v363
  %476 = vmatprep.subr.bf16.mxu0 0
  %477 = vmatpush1.bf16.msra.mxu0 %v364
  %478 = vmatprep.subr.bf16.mxu0 0
  %479 = vmatpush1.bf16.msra.mxu0 %v365
  %480 = vmatprep.subr.bf16.mxu0 0
  %481 = vmatpush1.bf16.msra.mxu0 %v366
  %482 = vmatprep.subr.bf16.mxu0 0
  %483 = vmatpush1.bf16.msra.mxu0 %v367
  %484 = vmatprep.subr.bf16.mxu0 0
  %485 = vmatpush1.bf16.msra.mxu0 %v368
  %486 = vmatprep.subr.bf16.mxu0 0
  %487 = vmatpush1.bf16.msra.mxu0 %v369
  %488 = vmatprep.subr.bf16.mxu0 0
  %489 = vmatpush1.bf16.msra.mxu0 %v370
  %490 = vmatprep.subr.bf16.mxu0 0
  %491 = vmatpush1.bf16.msra.mxu0 %v371
  %492 = vmatprep.mubr.bf16.mxu0 %v47
  %493 = vmatmul.mubr.bf16.gmra.mrb[0].mxu0 %v46
  %v494 = vpop.f32.mrb[0].mxu0
  %v495 = vadd.f32 %v455, %v494
  %v496 = vpop.f32.mrb[0].mxu0
  %v497 = vpop.f32.mrb[0].mxu0
  %v498 = vpop.f32.mrb[0].mxu0
  %499 = vdwg.mxu0
  %500 = vmatprep.subr.bf16.mxu0 0
  %501 = vmatpush1.bf16.msra.mxu0 %v372
  %502 = vmatprep.subr.bf16.mxu0 0
  %503 = vmatpush1.bf16.msra.mxu0 %v373
  %504 = vmatprep.subr.bf16.mxu0 0
  %505 = vmatpush1.bf16.msra.mxu0 %v374
  %506 = vmatprep.subr.bf16.mxu0 0
  %507 = vmatpush1.bf16.msra.mxu0 %v375
  %508 = vmatprep.subr.bf16.mxu0 0
  %509 = vmatpush1.bf16.msra.mxu0 %v376
  %510 = vmatprep.subr.bf16.mxu0 0
  %511 = vmatpush1.bf16.msra.mxu0 %v377
  %512 = vmatprep.subr.bf16.mxu0 0
  %513 = vmatpush1.bf16.msra.mxu0 %v378
  %514 = vmatprep.subr.bf16.mxu0 0
  %515 = vmatpush1.bf16.msra.mxu0 %v379
  %516 = vmatprep.subr.bf16.mxu0 0
  %517 = vmatpush1.bf16.msra.mxu0 0
  %518 = vmatprep.subr.bf16.mxu0 0
  %519 = vmatpush1.bf16.msra.mxu0 0
  %520 = vmatprep.subr.bf16.mxu0 0
  %521 = vmatpush1.bf16.msra.mxu0 0
  %522 = vmatprep.subr.bf16.mxu0 0
  %523 = vmatpush1.bf16.msra.mxu0 0
  %524 = vmatprep.subr.bf16.mxu0 0
  %525 = vmatpush1.bf16.msra.mxu0 0
  %526 = vmatprep.subr.bf16.mxu0 0
  %527 = vmatpush1.bf16.msra.mxu0 0
  %528 = vmatprep.subr.bf16.mxu0 0
  %529 = vmatpush1.bf16.msra.mxu0 0
  %530 = vmatprep.subr.bf16.mxu0 0
  %531 = vmatpush1.bf16.msra.mxu0 0
  %532 = vmatprep.mubr.bf16.mxu0 0
  %533 = vmatmul.mubr.bf16.gmra.mrb[0].mxu0 %v48
  %v534 = vpop.f32.mrb[0].mxu0
  %v535 = vadd.f32 %v495, %v534
  %v536 = vpop.f32.mrb[0].mxu0
  %v537 = vpop.f32.mrb[0].mxu0
  %v538 = vpop.f32.mrb[0].mxu0
  %539 = vdwg.mxu0
  %v540 = vld [vmem:[%s4] sm:$0x1]
  %v542 = vlaneseq
  %v543 = vshrl.u32 %v542, 7
  %v544 = vsub.s32 0, %v543
  %v545 = vrot.slane %v540, %v544
  %v547 = vadd.f32 %v535, %v545
  %v548 = vmax.f32 %v547, 0.0
  %v549 = vpack.c.bf16 %v548, %v548
  %v550 = vld [vmem:[%s5] sm:$0xf]
  %v551 = vld [vmem:[%s5 + $0x4] sm:$0xf]
  %v552 = vld [vmem:[%s5 + $0x8] sm:$0xf]
  %v553 = vld [vmem:[%s5 + $0xc] sm:$0xf]
  %v554 = vld [vmem:[%s5 + $0x10] sm:$0xf]
  %v555 = vld [vmem:[%s5 + $0x14] sm:$0xf]
  %v556 = vld [vmem:[%s5 + $0x18] sm:$0xf]
  %v557 = vld [vmem:[%s5 + $0x1c] sm:$0xf]
  %v558 = vld [vmem:[%s6] sm:$0x1]
  %v560 = vlaneseq
  %v561 = vshrl.u32 %v560, 7
  %v562 = vsub.s32 0, %v561
  %v563 = vrot.slane %v558, %v562
  %v573 = vunpack.c.l.b16 %v550
  %v574 = vunpack.c.l.b16 %v551
  %v575 = vunpack.c.l.b16 %v552
  %v576 = vunpack.c.l.b16 %v553
  %v577 = vunpack.c.l.b16 %v554
  %v578 = vunpack.c.l.b16 %v555
  %v579 = vunpack.c.l.b16 %v556
  %v580 = vunpack.c.l.b16 %v557
  %v581 = vpack.c.b16 %v574, %v573
  %v582 = vpack.c.b16 %v576, %v575
  %v583 = vpack.c.b16 %v578, %v577
  %v584 = vpack.c.b16 %v580, %v579
  %vm589 = vcmask 523264
  %v591 = vsel %vm589, %v549, 0
  %593 = vmatprep.subr.bf16.mxu0 0
  %594 = vmatpush1.bf16.msra.mxu0 %v581
  %595 = vmatprep.subr.bf16.mxu0 0
  %596 = vmatpush1.bf16.msra.mxu0 %v582
  %597 = vmatprep.subr.bf16.mxu0 0
  %598 = vmatpush1.bf16.msra.mxu0 %v583
  %599 = vmatprep.subr.bf16.mxu0 0
  %600 = vmatpush1.bf16.msra.mxu0 %v584
  %601 = vmatprep.subr.bf16.mxu0 0
  %602 = vmatpush1.bf16.msra.mxu0 0
  %603 = vmatprep.subr.bf16.mxu0 0
  %604 = vmatpush1.bf16.msra.mxu0 0
  %605 = vmatprep.subr.bf16.mxu0 0
  %606 = vmatpush1.bf16.msra.mxu0 0
  %607 = vmatprep.subr.bf16.mxu0 0
  %608 = vmatpush1.bf16.msra.mxu0 0
  %609 = vmatprep.subr.bf16.mxu0 0
  %610 = vmatpush1.bf16.msra.mxu0 0
  %611 = vmatprep.subr.bf16.mxu0 0
  %612 = vmatpush1.bf16.msra.mxu0 0
  %613 = vmatprep.subr.bf16.mxu0 0
  %614 = vmatpush1.bf16.msra.mxu0 0
  %615 = vmatprep.subr.bf16.mxu0 0
  %616 = vmatpush1.bf16.msra.mxu0 0
  %617 = vmatprep.subr.bf16.mxu0 0
  %618 = vmatpush1.bf16.msra.mxu0 0
  %619 = vmatprep.subr.bf16.mxu0 0
  %620 = vmatpush1.bf16.msra.mxu0 0
  %621 = vmatprep.subr.bf16.mxu0 0
  %622 = vmatpush1.bf16.msra.mxu0 0
  %623 = vmatprep.subr.bf16.mxu0 0
  %624 = vmatpush1.bf16.msra.mxu0 0
  %625 = vmatprep.mubr.bf16.mxu0 0
  %626 = vmatmul.mubr.bf16.gmra.mrb[0].mxu0 %v591
  %v627 = vpop.f32.mrb[0].mxu0
  %v628 = vadd.f32 %v563, %v627
  %v629 = vpop.f32.mrb[0].mxu0
  %v630 = vpop.f32.mrb[0].mxu0
  %v631 = vpop.f32.mrb[0].mxu0
  %632 = vdwg.mxu0
  %v633 = vmax.f32 %v628, 0.0
  %v634 = vpack.c.bf16 %v633, %v633
  %v635 = vld [vmem:[%s7] sm:$0xf]
  %v636 = vld [vmem:[%s7 + $0x4] sm:$0xf]
  %v637 = vld [vmem:[%s7 + $0x8] sm:$0xf]
  %v638 = vld [vmem:[%s7 + $0xc] sm:$0xf]
  %v639 = vld [vmem:[%s7 + $0x10] sm:$0xf]
  %v640 = vld [vmem:[%s7 + $0x14] sm:$0xf]
  %v641 = vld [vmem:[%s7 + $0x18] sm:$0xf]
  %v642 = vld [vmem:[%s7 + $0x1c] sm:$0xf]
  %v643 = vld [vmem:[%s8] sm:$0x1]
  %v645 = vlaneseq
  %v646 = vshrl.u32 %v645, 7
  %v647 = vsub.s32 0, %v646
  %v648 = vrot.slane %v643, %v647
  %v658 = vunpack.c.l.b16 %v635
  %v659 = vunpack.c.l.b16 %v636
  %v660 = vunpack.c.l.b16 %v637
  %v661 = vunpack.c.l.b16 %v638
  %v662 = vunpack.c.l.b16 %v639
  %v663 = vunpack.c.l.b16 %v640
  %v664 = vunpack.c.l.b16 %v641
  %v665 = vunpack.c.l.b16 %v642
  %v666 = vpack.c.b16 %v659, %v658
  %v667 = vpack.c.b16 %v661, %v660
  %v668 = vpack.c.b16 %v663, %v662
  %v669 = vpack.c.b16 %v665, %v664
  %v675 = vsel %vm589, %v634, 0
  %677 = vmatprep.subr.bf16.mxu0 0
  %678 = vmatpush1.bf16.msra.mxu0 %v666
  %679 = vmatprep.subr.bf16.mxu0 0
  %680 = vmatpush1.bf16.msra.mxu0 %v667
  %681 = vmatprep.subr.bf16.mxu0 0
  %682 = vmatpush1.bf16.msra.mxu0 %v668
  %683 = vmatprep.subr.bf16.mxu0 0
  %684 = vmatpush1.bf16.msra.mxu0 %v669
  %685 = vmatprep.subr.bf16.mxu0 0
  %686 = vmatpush1.bf16.msra.mxu0 0
  %687 = vmatprep.subr.bf16.mxu0 0
  %688 = vmatpush1.bf16.msra.mxu0 0
  %689 = vmatprep.subr.bf16.mxu0 0
  %690 = vmatpush1.bf16.msra.mxu0 0
  %691 = vmatprep.subr.bf16.mxu0 0
  %692 = vmatpush1.bf16.msra.mxu0 0
  %693 = vmatprep.subr.bf16.mxu0 0
  %694 = vmatpush1.bf16.msra.mxu0 0
  %695 = vmatprep.subr.bf16.mxu0 0
  %696 = vmatpush1.bf16.msra.mxu0 0
  %697 = vmatprep.subr.bf16.mxu0 0
  %698 = vmatpush1.bf16.msra.mxu0 0
  %699 = vmatprep.subr.bf16.mxu0 0
  %700 = vmatpush1.bf16.msra.mxu0 0
  %701 = vmatprep.subr.bf16.mxu0 0
  %702 = vmatpush1.bf16.msra.mxu0 0
  %703 = vmatprep.subr.bf16.mxu0 0
  %704 = vmatpush1.bf16.msra.mxu0 0
  %705 = vmatprep.subr.bf16.mxu0 0
  %706 = vmatpush1.bf16.msra.mxu0 0
  %707 = vmatprep.subr.bf16.mxu0 0
  %708 = vmatpush1.bf16.msra.mxu0 0
  %709 = vmatprep.mubr.bf16.mxu0 0
  %710 = vmatmul.mubr.bf16.gmra.mrb[0].mxu0 %v675
  %v711 = vpop.f32.mrb[0].mxu0
  %v712 = vadd.f32 %v648, %v711
  %v713 = vpop.f32.mrb[0].mxu0
  %v714 = vpop.f32.mrb[0].mxu0
  %v715 = vpop.f32.mrb[0].mxu0
  %716 = vdwg.mxu0
  %v717 = vmax.f32 %v712, 0.0
  %v718 = vpack.c.bf16 %v717, %v717
  %v719 = vld [vmem:[%s9] sm:$0xf]
  %v720 = vld [vmem:[%s9 + $0x4] sm:$0xf]
  %v721 = vld [vmem:[%s9 + $0x8] sm:$0xf]
  %v722 = vld [vmem:[%s9 + $0xc] sm:$0xf]
  %v723 = vld [vmem:[%s9 + $0x10] sm:$0xf]
  %v724 = vld [vmem:[%s9 + $0x14] sm:$0xf]
  %v725 = vld [vmem:[%s9 + $0x18] sm:$0xf]
  %v726 = vld [vmem:[%s9 + $0x1c] sm:$0xf]
  %v727 = vld [vmem:[%s10] sm:$0x1]
  %v729 = vlaneseq
  %v730 = vshrl.u32 %v729, 7
  %v731 = vsub.s32 0, %v730
  %v732 = vrot.slane %v727, %v731
  %v742 = vunpack.c.l.b16 %v719
  %v743 = vunpack.c.l.b16 %v720
  %v744 = vunpack.c.l.b16 %v721
  %v745 = vunpack.c.l.b16 %v722
  %v746 = vunpack.c.l.b16 %v723
  %v747 = vunpack.c.l.b16 %v724
  %v748 = vunpack.c.l.b16 %v725
  %v749 = vunpack.c.l.b16 %v726
  %v750 = vpack.c.b16 %v743, %v742
  %v751 = vpack.c.b16 %v745, %v744
  %v752 = vpack.c.b16 %v747, %v746
  %v753 = vpack.c.b16 %v749, %v748
  %v759 = vsel %vm589, %v718, 0
  %761 = vmatprep.subr.bf16.mxu0 0
  %762 = vmatpush1.bf16.msra.mxu0 %v750
  %763 = vmatprep.subr.bf16.mxu0 0
  %764 = vmatpush1.bf16.msra.mxu0 %v751
  %765 = vmatprep.subr.bf16.mxu0 0
  %766 = vmatpush1.bf16.msra.mxu0 %v752
  %767 = vmatprep.subr.bf16.mxu0 0
  %768 = vmatpush1.bf16.msra.mxu0 %v753
  %769 = vmatprep.subr.bf16.mxu0 0
  %770 = vmatpush1.bf16.msra.mxu0 0
  %771 = vmatprep.subr.bf16.mxu0 0
  %772 = vmatpush1.bf16.msra.mxu0 0
  %773 = vmatprep.subr.bf16.mxu0 0
  %774 = vmatpush1.bf16.msra.mxu0 0
  %775 = vmatprep.subr.bf16.mxu0 0
  %776 = vmatpush1.bf16.msra.mxu0 0
  %777 = vmatprep.subr.bf16.mxu0 0
  %778 = vmatpush1.bf16.msra.mxu0 0
  %779 = vmatprep.subr.bf16.mxu0 0
  %780 = vmatpush1.bf16.msra.mxu0 0
  %781 = vmatprep.subr.bf16.mxu0 0
  %782 = vmatpush1.bf16.msra.mxu0 0
  %783 = vmatprep.subr.bf16.mxu0 0
  %784 = vmatpush1.bf16.msra.mxu0 0
  %785 = vmatprep.subr.bf16.mxu0 0
  %786 = vmatpush1.bf16.msra.mxu0 0
  %787 = vmatprep.subr.bf16.mxu0 0
  %788 = vmatpush1.bf16.msra.mxu0 0
  %789 = vmatprep.subr.bf16.mxu0 0
  %790 = vmatpush1.bf16.msra.mxu0 0
  %791 = vmatprep.subr.bf16.mxu0 0
  %792 = vmatpush1.bf16.msra.mxu0 0
  %793 = vmatprep.mubr.bf16.mxu0 0
  %794 = vmatmul.mubr.bf16.gmra.mrb[0].mxu0 %v759
  %v795 = vpop.f32.mrb[0].mxu0
  %v796 = vadd.f32 %v732, %v795
  %v797 = vpop.f32.mrb[0].mxu0
  %v798 = vpop.f32.mrb[0].mxu0
  %v799 = vpop.f32.mrb[0].mxu0
  %800 = vdwg.mxu0
  %801 = vst [vmem:[%s11] sm:$0xff] %v796
  // Predicated region
  $region46: #{encoder_forward.1} parent=0 // pred_check
    _
  $region47: #{encoder_forward.1} parent=0 // pred_check_branch
    %803 = sbr.rel (0) target = $region49
  $region48: #{encoder_forward.1} parent=0 // pred_region
    _
  $region49: #{encoder_forward.1} parent=0 // pred_fallthru
    _
  // Predicated region
  $region50: #{encoder_forward.1} parent=0 // pred_check
    _
  $region51: #{encoder_forward.1} parent=0 // pred_check_branch
    %805 = sbr.rel (0) target = $region53
  $region52: #{encoder_forward.1} parent=0 // pred_region
    _
  $region53: #{encoder_forward.1} parent=0 // pred_fallthru
    _

</llo_original>
